<compile_context>
chip_gen: v5e
topology: v5e:2x2
jax: 0.10.0
libtpu: 0.0.40
codegen_flags: <defaults>
</compile_context>

<pallas_src>
import jax
import jax.numpy as jnp
from jax import lax
from jax.experimental import pallas as pl
from jax.experimental.pallas import tpu as pltpu


def _continuous_nl_kernel(m_ref, P_ref, W1_ref, b1_ref, W2_ref, b2_ref, wg_ref,
                          vm_ref, vP_ref):
    m = m_ref[...]          # (bb, Z)   block of batch rows
    P = P_ref[...]          # (bb, Z, Z)
    W1 = W1_ref[...]        # (H, Z)    resident in VMEM (not block-pipelined)
    b1 = b1_ref[...]        # (1, H)
    W2 = W2_ref[...]        # (Z, H)
    b2 = b2_ref[...]        # (1, Z)
    wg = wg_ref[...]        # (1, Z)

    bb, Z = m.shape
    H = W1.shape[0]

    # --- velocity_m = f(m) for the whole batch block: two block MXU matmuls ---
    h = lax.dot_general(m, W1, (((1,), (1,)), ((), ())),
                        preferred_element_type=jnp.float32) + b1       # (bb, H)
    a = jnp.tanh(h)
    vm = lax.dot_general(a, W2, (((1,), (1,)), ((), ())),
                         preferred_element_type=jnp.float32) + b2      # (bb, Z)
    vm_ref[...] = vm

    # --- analytic batch Jacobian:  J_b = W2 @ diag(1 - a_b^2) @ W1 ---
    s = 1.0 - a * a                                                    # (bb, H)
    scaled_W2 = W2[None, :, :] * s[:, None, :]                         # (bb, Z, H)
    W1_b = jnp.broadcast_to(W1[None, :, :], (bb, H, Z))                # hoisted, once per block
    J = jnp.einsum('bzh,bhy->bzy', scaled_W2, W1_b,
                   preferred_element_type=jnp.float32)                 # (bb, Z, Z)

    # --- GQGt = diag_embed(clamp((exp(wg * m))^2, min=1e-4)) ---
    diag_G = jnp.exp(wg * m)                                           # (bb, Z)
    diag_Gsq = jnp.maximum(diag_G * diag_G, 1e-4)                      # (bb, Z)
    # batch-independent diagonal mask, built once per grid step
    row = lax.broadcasted_iota(jnp.int32, (Z, Z), 0)
    col = lax.broadcasted_iota(jnp.int32, (Z, Z), 1)
    eye = jnp.where(row == col, 1.0, 0.0).astype(jnp.float32)          # (Z, Z)
    # eye zeroes the off-diagonal, so broadcasting diag_Gsq along rows is equivalent
    # to placing diag_Gsq[b, i] at position [b, i, i].
    gqgt = eye[None, :, :] * diag_Gsq[:, None, :]                      # (bb, Z, Z)

    # --- velocity_P = J @ P + P @ J^T + GQGt  (batched over the block) ---
    JP = jnp.einsum('bik,bkj->bij', J, P, preferred_element_type=jnp.float32)
    PJt = jnp.einsum('bik,bjk->bij', P, J, preferred_element_type=jnp.float32)
    vP_ref[...] = JP + PJt + gqgt


def _choose_block_b(batch: int) -> int:
    """Batch rows per grid step: multiple of 8 (f32 sublane tile), capped at 256 MXU rows."""
    bb = -(-batch // 8) * 8                 # round up to sublane multiple
    if bb <= 16:
        return bb                           # trivially small batch: single grid step
    if bb <= 256:
        # keep >= 2 grid steps so both v7x TensorCores get a share of the batch
        return -(-(bb // 2) // 8) * 8
    return 256                              # large batch: MXU-row-sized blocks, grid >= 2


def continuous_nl_forward(t, m, P, W1, b1, W2, b2, wg, *, block_b=None):
    """Pallas implementation of ContinuousNL.forward(t, (m, P))."""
    # `t` is accepted for API parity but unused by the dynamics (autonomous SDE),
    # exactly as in the PyTorch module.
    del t
    B, Z = m.shape
    H = W1.shape[0]

    bb = block_b if block_b is not None else _choose_block_b(B)
    Bp = pl.cdiv(B, bb) * bb

    m32 = m.astype(jnp.float32)
    P32 = P.astype(jnp.float32)
    if Bp != B:                             # zero-pad batch to a whole number of blocks
        m32 = jnp.pad(m32, ((0, Bp - B), (0, 0)))
        P32 = jnp.pad(P32, ((0, Bp - B), (0, 0), (0, 0)))

    b1r = b1.reshape(1, H).astype(jnp.float32)
    b2r = b2.reshape(1, Z).astype(jnp.float32)
    wgr = wg.reshape(1, Z).astype(jnp.float32)

    # Small weights: whole-array VMEM residents, no per-step block pipelining.
    resident = pl.BlockSpec(memory_space=pltpu.MemorySpace.VMEM)

    vm, vP = pl.pallas_call(
        _continuous_nl_kernel,
        out_shape=(jax.ShapeDtypeStruct((Bp, Z), jnp.float32),
                   jax.ShapeDtypeStruct((Bp, Z, Z), jnp.float32)),
        grid_spec=pltpu.PrefetchScalarGridSpec(
            num_scalar_prefetch=0,
            grid=(Bp // bb,),
            in_specs=[
                pl.BlockSpec((bb, Z), lambda b: (b, 0)),          # m (batch block)
                pl.BlockSpec((bb, Z, Z), lambda b: (b, 0, 0)),    # P (batch block)
                resident,                                         # W1
                resident,                                         # b1
                resident,                                         # W2
                resident,                                         # b2
                resident,                                         # wg (diffusion weights)
            ],
            out_specs=(
                pl.BlockSpec((bb, Z), lambda b: (b, 0)),          # velocity_m
                pl.BlockSpec((bb, Z, Z), lambda b: (b, 0, 0)),    # velocity_P
            ),
        ),
        compiler_params=pltpu.CompilerParams(
            dimension_semantics=("parallel",)),
    )(m32, P32, W1.astype(jnp.float32), b1r, W2.astype(jnp.float32), b2r, wgr)

    if Bp != B:
        vm = vm[:B]
        vP = vP[:B]
    return vm, vP


def reference_forward(m, P, W1, b1, W2, b2, wg):
    """Pure-JAX reference matching the PyTorch module semantics."""
    h = m @ W1.T + b1
    a = jnp.tanh(h)
    vm = a @ W2.T + b2
    s = 1.0 - a * a
    J = jnp.einsum('zh,bh,hy->bzy', W2, s, W1)              # batch Jacobian of f
    diag_G = jnp.exp(wg[None, :] * m)
    diag_Gsq = jnp.maximum(diag_G * diag_G, 1e-4)
    GQGt = jax.vmap(jnp.diag)(diag_Gsq)
    vP = J @ P + P @ jnp.swapaxes(J, -1, -2) + GQGt
    return vm, vP


if __name__ == "__main__":
    key = jax.random.PRNGKey(0)
    B, Z, H = 4, 16, 32
    ks = jax.random.split(key, 7)

    m = jax.random.normal(ks[0], (B, Z), dtype=jnp.float32)
    A = jax.random.normal(ks[1], (B, Z, Z), dtype=jnp.float32) * 0.1
    P = A @ jnp.swapaxes(A, -1, -2) + 0.5 * jnp.eye(Z, dtype=jnp.float32)  # SPD covariance

    # Deterministic synthetic parameters for f and gs (no checkpoint loading).
    W1 = jax.random.normal(ks[2], (H, Z), dtype=jnp.float32) * 0.2
    b1 = jax.random.normal(ks[3], (H,), dtype=jnp.float32) * 0.1
    W2 = jax.random.normal(ks[4], (Z, H), dtype=jnp.float32) * 0.2
    b2 = jax.random.normal(ks[5], (Z,), dtype=jnp.float32) * 0.1
    wg = jax.random.normal(ks[6], (Z,), dtype=jnp.float32) * 0.3

    t = jnp.zeros((1,), dtype=jnp.float32)  # unused by the dynamics

    vm, vP = continuous_nl_forward(t, m, P, W1, b1, W2, b2, wg)
    jax.block_until_ready((vm, vP))

    vm_ref, vP_ref = reference_forward(m, P, W1, b1, W2, b2, wg)
    assert vm.shape == (B, Z) and vP.shape == (B, Z, Z)
    assert jnp.allclose(vm, vm_ref, atol=1e-4, rtol=1e-4)
    assert jnp.allclose(vP, vP_ref, atol=1e-4, rtol=1e-4)

    print("KERNEL_OK")
</pallas_src>

<mosaic_0001>
module attributes {stable_mosaic.version = 11 : i64} {
  func.func @_continuous_nl_kernel(%arg0: i32, %arg1: memref<8x16xf32, #tpu.memory_space<vmem>>, %arg2: memref<8x16x16xf32, #tpu.memory_space<vmem>>, %arg3: memref<32x16xf32, #tpu.memory_space<vmem>>, %arg4: memref<1x32xf32, #tpu.memory_space<vmem>>, %arg5: memref<16x32xf32, #tpu.memory_space<vmem>>, %arg6: memref<1x16xf32, #tpu.memory_space<vmem>>, %arg7: memref<1x16xf32, #tpu.memory_space<vmem>>, %arg8: memref<8x16xf32, #tpu.memory_space<vmem>>, %arg9: memref<8x16x16xf32, #tpu.memory_space<vmem>>) attributes {dimension_semantics = [#tpu.dimension_semantics<parallel>], iteration_bounds = array<i64: 1>, scalar_prefetch = 0 : i64, scratch_operands = 0 : i64, tpu.core_type = #tpu.core_type<tc>, window_params = [{transform_indices = @transform_0, window_bounds = array<i64: 8, 16>}, {transform_indices = @transform_1, window_bounds = array<i64: 8, 16, 16>}, {pipeline_mode = #tpu.pipeline_mode<synchronous>, transform_indices = @transform_2, window_bounds = array<i64: 32, 16>}, {pipeline_mode = #tpu.pipeline_mode<synchronous>, transform_indices = @transform_3, window_bounds = array<i64: 1, 32>}, {pipeline_mode = #tpu.pipeline_mode<synchronous>, transform_indices = @transform_4, window_bounds = array<i64: 16, 32>}, {pipeline_mode = #tpu.pipeline_mode<synchronous>, transform_indices = @transform_5, window_bounds = array<i64: 1, 16>}, {pipeline_mode = #tpu.pipeline_mode<synchronous>, transform_indices = @transform_6, window_bounds = array<i64: 1, 16>}, {transform_indices = @transform_7, window_bounds = array<i64: 8, 16>}, {transform_indices = @transform_8, window_bounds = array<i64: 8, 16, 16>}]} {
    %c0 = arith.constant 0 : index
    %c0_0 = arith.constant 0 : index
    %0 = vector.load %arg1[%c0, %c0_0] : memref<8x16xf32, #tpu.memory_space<vmem>>, vector<8x16xf32>
    %c0_1 = arith.constant 0 : index
    %c0_2 = arith.constant 0 : index
    %c0_3 = arith.constant 0 : index
    %1 = vector.load %arg2[%c0_1, %c0_2, %c0_3] : memref<8x16x16xf32, #tpu.memory_space<vmem>>, vector<8x16x16xf32>
    %c0_4 = arith.constant 0 : index
    %c0_5 = arith.constant 0 : index
    %2 = vector.load %arg3[%c0_4, %c0_5] : memref<32x16xf32, #tpu.memory_space<vmem>>, vector<32x16xf32>
    %c0_6 = arith.constant 0 : index
    %c0_7 = arith.constant 0 : index
    %3 = vector.load %arg4[%c0_6, %c0_7] : memref<1x32xf32, #tpu.memory_space<vmem>>, vector<1x32xf32>
    %c0_8 = arith.constant 0 : index
    %c0_9 = arith.constant 0 : index
    %4 = vector.load %arg5[%c0_8, %c0_9] : memref<16x32xf32, #tpu.memory_space<vmem>>, vector<16x32xf32>
    %c0_10 = arith.constant 0 : index
    %c0_11 = arith.constant 0 : index
    %5 = vector.load %arg6[%c0_10, %c0_11] : memref<1x16xf32, #tpu.memory_space<vmem>>, vector<1x16xf32>
    %c0_12 = arith.constant 0 : index
    %c0_13 = arith.constant 0 : index
    %6 = vector.load %arg7[%c0_12, %c0_13] : memref<1x16xf32, #tpu.memory_space<vmem>>, vector<1x16xf32>
    %cst = arith.constant dense<0.000000e+00> : vector<8x32xf32>
    %7 = tpu.matmul %0, %2, %cst {dimension_numbers = #tpu.dot_dimension_numbers<[1], [1], [0], [0], [0, 0, 1, 0], [], []>} : vector<8x16xf32>, vector<32x16xf32>, vector<8x32xf32> -> vector<8x32xf32>
    %8 = vector.broadcast %3 : vector<1x32xf32> to vector<8x32xf32>
    %9 = arith.addf %7, %8 : vector<8x32xf32>
    %10 = math.tanh %9 : vector<8x32xf32>
    %cst_14 = arith.constant dense<0.000000e+00> : vector<8x16xf32>
    %11 = tpu.matmul %10, %4, %cst_14 {dimension_numbers = #tpu.dot_dimension_numbers<[1], [1], [0], [0], [0, 0, 1, 0], [], []>} : vector<8x32xf32>, vector<16x32xf32>, vector<8x16xf32> -> vector<8x16xf32>
    %12 = vector.broadcast %5 : vector<1x16xf32> to vector<8x16xf32>
    %13 = arith.addf %11, %12 : vector<8x16xf32>
    %c0_15 = arith.constant 0 : index
    %c0_16 = arith.constant 0 : index
    %14 = vector.load %arg8[%c0_15, %c0_16] : memref<8x16xf32, #tpu.memory_space<vmem>>, vector<8x16xf32>
    tpu.vector_store %arg8[%c0_15, %c0_16], %13 {strides = array<i32>} : memref<8x16xf32, #tpu.memory_space<vmem>>, vector<8x16xf32>,
    %15 = arith.mulf %10, %10 : vector<8x32xf32>
    %cst_17 = arith.constant 1.000000e+00 : f32
    %16 = vector.broadcast %cst_17 : f32 to vector<8x32xf32>
    %17 = arith.subf %16, %15 : vector<8x32xf32>
    %18 = vector.shape_cast %4 : vector<16x32xf32> to vector<1x16x32xf32>
    %19 = vector.shape_cast %17 : vector<8x32xf32> to vector<8x1x32xf32>
    %20 = vector.broadcast %18 : vector<1x16x32xf32> to vector<8x16x32xf32>
    %21 = vector.broadcast %19 : vector<8x1x32xf32> to vector<8x16x32xf32>
    %22 = arith.mulf %20, %21 : vector<8x16x32xf32>
    %23 = vector.shape_cast %2 : vector<32x16xf32> to vector<1x32x16xf32>
    %24 = vector.shape_cast %23 : vector<1x32x16xf32> to vector<1x32x16xf32>
    %25 = vector.broadcast %24 : vector<1x32x16xf32> to vector<8x32x16xf32>
    "tpu.trace_start"() <{level = 10 : i32, message = "bzh,bhy->bzy"}> : () -> ()
    %cst_18 = arith.constant dense<0.000000e+00> : vector<8x16x16xf32>
    %26 = tpu.matmul %22, %25, %cst_18 {dimension_numbers = #tpu.dot_dimension_numbers<[2], [1], [1], [2], [0, 0, 0, 1, 1, 2], [0], [0]>} : vector<8x16x32xf32>, vector<8x32x16xf32>, vector<8x16x16xf32> -> vector<8x16x16xf32>
    "tpu.trace_stop"() : () -> ()
    %27 = vector.broadcast %6 : vector<1x16xf32> to vector<8x16xf32>
    %28 = arith.mulf %27, %0 : vector<8x16xf32>
    %29 = math.exp %28 : vector<8x16xf32>
    %30 = arith.mulf %29, %29 : vector<8x16xf32>
    %cst_19 = arith.constant 9.99999974E-5 : f32
    %31 = vector.broadcast %cst_19 : f32 to vector<8x16xf32>
    %32 = arith.maximumf %30, %31 : vector<8x16xf32>
    %33 = tpu.iota {dimensions = array<i32: 0>} : vector<16x16xi32>
    %34 = tpu.iota {dimensions = array<i32: 1>} : vector<16x16xi32>
    %35 = arith.cmpi eq, %33, %34 : vector<16x16xi32>
    %cst_20 = arith.constant 1.000000e+00 : f32
    %cst_21 = arith.constant 0.000000e+00 : f32
    %36 = vector.broadcast %cst_20 : f32 to vector<16x16xf32>
    %37 = vector.broadcast %cst_21 : f32 to vector<16x16xf32>
    %38 = arith.select %35, %36, %37 : vector<16x16xi1>, vector<16x16xf32>
    %39 = vector.shape_cast %38 : vector<16x16xf32> to vector<1x16x16xf32>
    %40 = vector.shape_cast %32 : vector<8x16xf32> to vector<8x1x16xf32>
    %41 = vector.broadcast %39 : vector<1x16x16xf32> to vector<8x16x16xf32>
    %42 = vector.broadcast %40 : vector<8x1x16xf32> to vector<8x16x16xf32>
    %43 = arith.mulf %41, %42 : vector<8x16x16xf32>
    "tpu.trace_start"() <{level = 10 : i32, message = "bik,bkj->bij"}> : () -> ()
    %cst_22 = arith.constant dense<0.000000e+00> : vector<8x16x16xf32>
    %44 = tpu.matmul %26, %1, %cst_22 {dimension_numbers = #tpu.dot_dimension_numbers<[2], [1], [1], [2], [0, 0, 0, 1, 1, 2], [0], [0]>} : vector<8x16x16xf32>, vector<8x16x16xf32>, vector<8x16x16xf32> -> vector<8x16x16xf32>
    "tpu.trace_stop"() : () -> ()
    "tpu.trace_start"() <{level = 10 : i32, message = "bik,bjk->bij"}> : () -> ()
    %cst_23 = arith.constant dense<0.000000e+00> : vector<8x16x16xf32>
    %45 = tpu.matmul %1, %26, %cst_23 {dimension_numbers = #tpu.dot_dimension_numbers<[2], [2], [1], [1], [0, 0, 0, 1, 1, 1], [0], [0]>} : vector<8x16x16xf32>, vector<8x16x16xf32>, vector<8x16x16xf32> -> vector<8x16x16xf32>
    "tpu.trace_stop"() : () -> ()
    %46 = arith.addf %44, %45 : vector<8x16x16xf32>
    %47 = arith.addf %46, %43 : vector<8x16x16xf32>
    %c0_24 = arith.constant 0 : index
    %c0_25 = arith.constant 0 : index
    %c0_26 = arith.constant 0 : index
    %48 = vector.load %arg9[%c0_24, %c0_25, %c0_26] : memref<8x16x16xf32, #tpu.memory_space<vmem>>, vector<8x16x16xf32>
    tpu.vector_store %arg9[%c0_24, %c0_25, %c0_26], %47 {strides = array<i32>} : memref<8x16x16xf32, #tpu.memory_space<vmem>>, vector<8x16x16xf32>,
    return
  }
  func.func @transform_0(%arg0: i32) -> (i32, i32) {
    %c0_i32 = arith.constant 0 : i32
    %c0_i32_0 = arith.constant 0 : i32
    return %arg0, %c0_i32 : i32, i32
  }
  func.func @transform_1(%arg0: i32) -> (i32, i32, i32) {
    %c0_i32 = arith.constant 0 : i32
    %c0_i32_0 = arith.constant 0 : i32
    %c0_i32_1 = arith.constant 0 : i32
    return %arg0, %c0_i32, %c0_i32_0 : i32, i32, i32
  }
  func.func @transform_2(%arg0: i32) -> (i32, i32) {
    %c0_i32 = arith.constant 0 : i32
    %c0_i32_0 = arith.constant 0 : i32
    %c0_i32_1 = arith.constant 0 : i32
    return %c0_i32, %c0_i32_0 : i32, i32
  }
  func.func @transform_3(%arg0: i32) -> (i32, i32) {
    %c0_i32 = arith.constant 0 : i32
    %c0_i32_0 = arith.constant 0 : i32
    %c0_i32_1 = arith.constant 0 : i32
    return %c0_i32, %c0_i32_0 : i32, i32
  }
  func.func @transform_4(%arg0: i32) -> (i32, i32) {
    %c0_i32 = arith.constant 0 : i32
    %c0_i32_0 = arith.constant 0 : i32
    %c0_i32_1 = arith.constant 0 : i32
    return %c0_i32, %c0_i32_0 : i32, i32
  }
  func.func @transform_5(%arg0: i32) -> (i32, i32) {
    %c0_i32 = arith.constant 0 : i32
    %c0_i32_0 = arith.constant 0 : i32
    %c0_i32_1 = arith.constant 0 : i32
    return %c0_i32, %c0_i32_0 : i32, i32
  }
  func.func @transform_6(%arg0: i32) -> (i32, i32) {
    %c0_i32 = arith.constant 0 : i32
    %c0_i32_0 = arith.constant 0 : i32
    %c0_i32_1 = arith.constant 0 : i32
    return %c0_i32, %c0_i32_0 : i32, i32
  }
  func.func @transform_7(%arg0: i32) -> (i32, i32) {
    %c0_i32 = arith.constant 0 : i32
    %c0_i32_0 = arith.constant 0 : i32
    return %arg0, %c0_i32 : i32, i32
  }
  func.func @transform_8(%arg0: i32) -> (i32, i32, i32) {
    %c0_i32 = arith.constant 0 : i32
    %c0_i32_0 = arith.constant 0 : i32
    %c0_i32_1 = arith.constant 0 : i32
    return %arg0, %c0_i32, %c0_i32_0 : i32, i32, i32
  }
}

</mosaic_0001>

<llo_original>
// kernel: tpu_custom_call.1
$region0: #{tpu_custom_call.1}
  #allocation0 [shape = 'u32[]', space=smem, size = 0x4, offset = 0x4, fixed_abs, tag = 'smem constant byte address 0x4 - core index']
  #allocation1 [shape = 'u32[72,128]{1,0:T(1,128)}', space=vmem, size = 0x9000, scoped, tag = 'internal scratch']
  %s0 = inlined_call_operand.vmem [shape: f32[8,16], index: 0, kind: input, shape index: {}]
  %s1 = inlined_call_operand.hbm [shape: f32[8,16,16], index: 1, kind: input, shape index: {}]
  %s2 = inlined_call_operand.vmem [shape: f32[32,16], index: 2, kind: input, shape index: {}]
  %s3 = inlined_call_operand.vmem [shape: f32[1,32], index: 3, kind: input, shape index: {}]
  %s4 = inlined_call_operand.vmem [shape: f32[16,32], index: 4, kind: input, shape index: {}]
  %s5 = inlined_call_operand.vmem [shape: f32[1,16], index: 5, kind: input, shape index: {}]
  %s6 = inlined_call_operand.vmem [shape: f32[1,16], index: 6, kind: input, shape index: {}]
  %s7 = inlined_call_operand.hbm [shape: f32[8,16], index: 7, kind: output, shape index: {0}]
  %s8 = inlined_call_operand.hbm [shape: f32[8,16,16], index: 8, kind: output, shape index: {1}]
  %9 = xla_tuple %s7, %s8
  %s10 = sld [smem:[#allocation0]]
  $region50: #{tpu_custom_call.1} parent=0
    _
  %s12 = ssub.s32 1, %s10
  %s13 = scalar_select 0, %s12, %s10
  $region1: #{tpu_custom_call.1} parent=0
    #allocation2 [shape = 'u8[65536]{0}', space=vmem, size = 0x10000, scoped, tag = 'input window, operand 1, single buffered']
    #allocation3 [shape = 's32[1]{0}', space=sflag, size = 0x4, scoped, tag = 'scoped memory for tpu_custom_call.1']
    #allocation4 [shape = 's32[1]{0}', space=sflag, size = 0x4, scoped, tag = 'scoped memory for tpu_custom_call.1']
    #allocation5 [shape = 'u8[4096]{0}', space=vmem, size = 0x1000, scoped, tag = 'output window, operand 0, single buffered']
    #allocation6 [shape = 'u8[65536]{0}', space=vmem, size = 0x10000, scoped, tag = 'output window, operand 1, single buffered']
    #allocation7 [shape = 's32[1]{0}', space=sflag, size = 0x4, scoped, tag = 'scoped memory for tpu_custom_call.1']
    %14 = vsyncpa [#allocation3], 0
    %15 = vsyncpa [#allocation4], 0
    %16 = vsyncpa [#allocation7], 0
    // Predicated region
    $region2: #{tpu_custom_call.1} parent=1 // pred_check
      _
    $region3: #{tpu_custom_call.1} parent=1 // pred_check_branch
      %18 = sbr.rel (0) target = $region5
    $region4: #{tpu_custom_call.1} parent=1 // pred_region
      _
    $region5: #{tpu_custom_call.1} parent=1 // pred_fallthru
      _
    // Predicated region
    $region6: #{tpu_custom_call.1} parent=1 // pred_check
      _
    $region7: #{tpu_custom_call.1} parent=1 // pred_check_branch
      %20 = sbr.rel (0) target = $region9
    $region8: #{tpu_custom_call.1} parent=1 // pred_region
      %22 = vsyncadd [#allocation3], 0
      %s23 = sshll.u32 %s1, 4
      %s24 = int_to_ptr.hbm [resolvable:$true] %s23
      %s25 = sshll.u32 [#allocation2], 4
      %s26 = int_to_ptr.vmem [resolvable:$true] %s25
      %31 = dma.hbm_to_vmem [thread:$0]  %s24, 2048, %s26, [#allocation3], 128, 128, 8
    $region9: #{tpu_custom_call.1} parent=1 // pred_fallthru
      _
    // Predicated region
    $region10: #{tpu_custom_call.1} parent=1 // pred_check
      _
    $region11: #{tpu_custom_call.1} parent=1 // pred_check_branch
      %33 = sbr.rel (0) target = $region13
    $region12: #{tpu_custom_call.1} parent=1 // pred_region
      _
    $region13: #{tpu_custom_call.1} parent=1 // pred_fallthru
      _
    // Predicated region
    $region14: #{tpu_custom_call.1} parent=1 // pred_check
      _
    $region15: #{tpu_custom_call.1} parent=1 // pred_check_branch
      %35 = sbr.rel (0) target = $region17
    $region16: #{tpu_custom_call.1} parent=1 // pred_region
      _
    $region17: #{tpu_custom_call.1} parent=1 // pred_fallthru
      _
    // Predicated region
    $region18: #{tpu_custom_call.1} parent=1 // pred_check
      _
    $region19: #{tpu_custom_call.1} parent=1 // pred_check_branch
      %37 = sbr.rel (0) target = $region21
    $region20: #{tpu_custom_call.1} parent=1 // pred_region
      _
    $region21: #{tpu_custom_call.1} parent=1 // pred_fallthru
      _
    // Predicated region
    $region22: #{tpu_custom_call.1} parent=1 // pred_check
      _
    $region23: #{tpu_custom_call.1} parent=1 // pred_check_branch
      %39 = sbr.rel (0) target = $region25
    $region24: #{tpu_custom_call.1} parent=1 // pred_region
      _
    $region25: #{tpu_custom_call.1} parent=1 // pred_fallthru
      _
    // Predicated region
    $region26: #{tpu_custom_call.1} parent=1 // pred_check
      _
    $region27: #{tpu_custom_call.1} parent=1 // pred_check_branch
      %41 = sbr.rel (0) target = $region29
    $region28: #{tpu_custom_call.1} parent=1 // pred_region
      _
    $region29: #{tpu_custom_call.1} parent=1 // pred_fallthru
      _
    // Predicated region
    $region30: #{tpu_custom_call.1} parent=1 // pred_check
      _
    $region31: #{tpu_custom_call.1} parent=1 // pred_check_branch
      %43 = sbr.rel (0) target = $region33
    $region32: #{tpu_custom_call.1} parent=1 // pred_region
      %45 = dma.done [#allocation3], 2048
    $region33: #{tpu_custom_call.1} parent=1 // pred_fallthru
      _
    %v46 = vld [vmem:[%s0] sm:$0xff]
    %v47 = vld [vmem:[#allocation2] sm:$0xff]
    %v48 = vld [vmem:[#allocation2 + $0x8] sm:$0xff]
    %v49 = vld [vmem:[#allocation2 + $0x10] sm:$0xff]
    %v50 = vld [vmem:[#allocation2 + $0x18] sm:$0xff]
    %v51 = vld [vmem:[#allocation2 + $0x20] sm:$0xff]
    %v52 = vld [vmem:[#allocation2 + $0x28] sm:$0xff]
    %v53 = vld [vmem:[#allocation2 + $0x30] sm:$0xff]
    %v54 = vld [vmem:[#allocation2 + $0x38] sm:$0xff]
    %v55 = vld [vmem:[#allocation2 + $0x40] sm:$0xff]
    %v56 = vld [vmem:[#allocation2 + $0x48] sm:$0xff]
    %v57 = vld [vmem:[#allocation2 + $0x50] sm:$0xff]
    %v58 = vld [vmem:[#allocation2 + $0x58] sm:$0xff]
    %v59 = vld [vmem:[#allocation2 + $0x60] sm:$0xff]
    %v60 = vld [vmem:[#allocation2 + $0x68] sm:$0xff]
    %v61 = vld [vmem:[#allocation2 + $0x70] sm:$0xff]
    %v62 = vld [vmem:[#allocation2 + $0x78] sm:$0xff]
    %v63 = vld [vmem:[%s2] sm:$0xff]
    %v64 = vld [vmem:[%s2 + $0x8] sm:$0xff]
    %v65 = vld [vmem:[%s2 + $0x10] sm:$0xff]
    %v66 = vld [vmem:[%s2 + $0x18] sm:$0xff]
    %v67 = vld [vmem:[%s3] sm:$0x1]
    %v68 = vld [vmem:[%s4] sm:$0xff]
    %v69 = vld [vmem:[%s4 + $0x8] sm:$0xff]
    %v70 = vld [vmem:[%s5] sm:$0x1]
    %v71 = vld [vmem:[%s6] sm:$0x1]
    %v73 = vperm.slane %v67, 0
    %vm75 = vcmask 130048
    %v77 = vsel %vm75, %v46, 0
    %v80 = vsel %vm75, %v63, 0
    %v83 = vsel %vm75, %v64, 0
    %v86 = vsel %vm75, %v65, 0
    %v89 = vsel %vm75, %v66, 0
    %91 = vmatpush.xpose.msra.mxu0 0.0
    %92 = vmatpush.xpose.msra.mxu0 0.0
    %93 = vmatpush.xpose.msra.mxu0 0.0
    %94 = vmatpush.xpose.msra.mxu0 0.0
    %95 = vmatpush.xpose.msra.mxu0 0.0
    %96 = vmatpush.xpose.msra.mxu0 0.0
    %97 = vmatpush.xpose.msra.mxu0 0.0
    %98 = vmatpush.xpose.msra.mxu0 0.0
    %99 = vmatpush.xpose.msra.mxu0 0.0
    %100 = vmatpush.xpose.msra.mxu0 0.0
    %101 = vmatpush.xpose.msra.mxu0 0.0
    %102 = vmatpush.xpose.msra.mxu0 0.0
    %103 = vmatpush.xpose.msra.mxu0 %v89
    %104 = vmatpush.xpose.msra.mxu0 %v86
    %105 = vmatpush.xpose.msra.mxu0 %v83
    %106 = vmatpush.xpose.msra.mxu0 %v80
    %107 = vmatmul.f32.gmra.mxu0 %v77
    %v108 = vpop.f32.mrf.mxu0
    %v109 = vadd.f32 %v73, %v108
    %110 = vdwg.mxu0
    %v111 = vtanh.pop %v109
    %v113 = vperm.slane %v70, 0
    %vm115 = vcmask 261120
    %v117 = vsel %vm115, %v111, 0
    %v120 = vsel %vm115, %v68, 0
    %v123 = vsel %vm115, %v69, 0
    %125 = vmatpush.xpose.msra.mxu0 0.0
    %126 = vmatpush.xpose.msra.mxu0 0.0
    %127 = vmatpush.xpose.msra.mxu0 0.0
    %128 = vmatpush.xpose.msra.mxu0 0.0
    %129 = vmatpush.xpose.msra.mxu0 0.0
    %130 = vmatpush.xpose.msra.mxu0 0.0
    %131 = vmatpush.xpose.msra.mxu0 0.0
    %132 = vmatpush.xpose.msra.mxu0 0.0
    %133 = vmatpush.xpose.msra.mxu0 0.0
    %134 = vmatpush.xpose.msra.mxu0 0.0
    %135 = vmatpush.xpose.msra.mxu0 0.0
    %136 = vmatpush.xpose.msra.mxu0 0.0
    %137 = vmatpush.xpose.msra.mxu0 0.0
    %138 = vmatpush.xpose.msra.mxu0 0.0
    %139 = vmatpush.xpose.msra.mxu0 %v123
    %140 = vmatpush.xpose.msra.mxu0 %v120
    %141 = vmatmul.f32.gmra.mxu0 %v117
    %v142 = vpop.f32.mrf.mxu0
    %v143 = vadd.f32 %v113, %v142
    %144 = vdwg.mxu0
    %145 = vst.msk [vmem:[#allocation5] sm:$0xff] %vm75, %v143
    %v146 = vmul.f32 %v111, %v111
    %v147 = vsub.f32 1.0, %v146
    %v149 = vrot.slane %v147, 1
    %v150 = vrot.slane %v147, 2
    %v151 = vrot.slane %v147, 3
    %v152 = vrot.slane %v147, 4
    %v153 = vrot.slane %v147, 5
    %v154 = vrot.slane %v147, 6
    %v155 = vrot.slane %v147, 7
    %v156 = vperm.slane %v147, 0
    %v157 = vperm.slane %v149, 0
    %v158 = vperm.slane %v150, 0
    %v159 = vperm.slane %v151, 0
    %v160 = vperm.slane %v152, 0
    %v161 = vperm.slane %v153, 0
    %v162 = vperm.slane %v154, 0
    %v163 = vperm.slane %v155, 0
    %v172 = vmul.f32 %v68, %v156
    %v173 = vmul.f32 %v69, %v156
    %v174 = vmul.f32 %v68, %v157
    %v175 = vmul.f32 %v69, %v157
    %v176 = vmul.f32 %v68, %v158
    %v177 = vmul.f32 %v69, %v158
    %v178 = vmul.f32 %v68, %v159
    %v179 = vmul.f32 %v69, %v159
    %v180 = vmul.f32 %v68, %v160
    %v181 = vmul.f32 %v69, %v160
    %v182 = vmul.f32 %v68, %v161
    %v183 = vmul.f32 %v69, %v161
    %v184 = vmul.f32 %v68, %v162
    %v185 = vmul.f32 %v69, %v162
    %v186 = vmul.f32 %v68, %v163
    %v187 = vmul.f32 %v69, %v163
    %v189 = vsel %vm115, %v172, 0
    %v192 = vsel %vm115, %v173, 0
    %194 = vmatpush.msra.mxu0 0.0
    %195 = vmatpush.msra.mxu0 0.0
    %196 = vmatpush.msra.mxu0 0.0
    %197 = vmatpush.msra.mxu0 0.0
    %198 = vmatpush.msra.mxu0 0.0
    %199 = vmatpush.msra.mxu0 0.0
    %200 = vmatpush.msra.mxu0 0.0
    %201 = vmatpush.msra.mxu0 0.0
    %202 = vmatpush.msra.mxu0 0.0
    %203 = vmatpush.msra.mxu0 0.0
    %204 = vmatpush.msra.mxu0 0.0
    %205 = vmatpush.msra.mxu0 0.0
    %206 = vmatpush.msra.mxu0 %v66
    %207 = vmatpush.msra.mxu0 %v65
    %208 = vmatpush.msra.mxu0 %v64
    %209 = vmatpush.msra.mxu0 %v63
    %210 = vmatmul.f32.gmra.mxu0 %v189
    %v211 = vpop.f32.mrf.mxu0
    %v212 = vadd.f32 0.0, %v211
    %213 = vmatmul.f32.gmra.mxu0 %v192
    %v214 = vpop.f32.mrf.mxu0
    %v215 = vadd.f32 0.0, %v214
    %216 = vdwg.mxu0
    %v218 = vsel %vm115, %v174, 0
    %v221 = vsel %vm115, %v175, 0
    %223 = vmatpush.msra.mxu0 0.0
    %224 = vmatpush.msra.mxu0 0.0
    %225 = vmatpush.msra.mxu0 0.0
    %226 = vmatpush.msra.mxu0 0.0
    %227 = vmatpush.msra.mxu0 0.0
    %228 = vmatpush.msra.mxu0 0.0
    %229 = vmatpush.msra.mxu0 0.0
    %230 = vmatpush.msra.mxu0 0.0
    %231 = vmatpush.msra.mxu0 0.0
    %232 = vmatpush.msra.mxu0 0.0
    %233 = vmatpush.msra.mxu0 0.0
    %234 = vmatpush.msra.mxu0 0.0
    %235 = vmatpush.msra.mxu0 %v66
    %236 = vmatpush.msra.mxu0 %v65
    %237 = vmatpush.msra.mxu0 %v64
    %238 = vmatpush.msra.mxu0 %v63
    %239 = vmatmul.f32.gmra.mxu0 %v218
    %v240 = vpop.f32.mrf.mxu0
    %v241 = vadd.f32 0.0, %v240
    %242 = vmatmul.f32.gmra.mxu0 %v221
    %v243 = vpop.f32.mrf.mxu0
    %v244 = vadd.f32 0.0, %v243
    %245 = vdwg.mxu0
    %v247 = vsel %vm115, %v176, 0
    %v250 = vsel %vm115, %v177, 0
    %252 = vmatpush.msra.mxu0 0.0
    %253 = vmatpush.msra.mxu0 0.0
    %254 = vmatpush.msra.mxu0 0.0
    %255 = vmatpush.msra.mxu0 0.0
    %256 = vmatpush.msra.mxu0 0.0
    %257 = vmatpush.msra.mxu0 0.0
    %258 = vmatpush.msra.mxu0 0.0
    %259 = vmatpush.msra.mxu0 0.0
    %260 = vmatpush.msra.mxu0 0.0
    %261 = vmatpush.msra.mxu0 0.0
    %262 = vmatpush.msra.mxu0 0.0
    %263 = vmatpush.msra.mxu0 0.0
    %264 = vmatpush.msra.mxu0 %v66
    %265 = vmatpush.msra.mxu0 %v65
    %266 = vmatpush.msra.mxu0 %v64
    %267 = vmatpush.msra.mxu0 %v63
    %268 = vmatmul.f32.gmra.mxu0 %v247
    %v269 = vpop.f32.mrf.mxu0
    %v270 = vadd.f32 0.0, %v269
    %271 = vmatmul.f32.gmra.mxu0 %v250
    %v272 = vpop.f32.mrf.mxu0
    %v273 = vadd.f32 0.0, %v272
    %274 = vdwg.mxu0
    %v276 = vsel %vm115, %v178, 0
    %v279 = vsel %vm115, %v179, 0
    %281 = vmatpush.msra.mxu0 0.0
    %282 = vmatpush.msra.mxu0 0.0
    %283 = vmatpush.msra.mxu0 0.0
    %284 = vmatpush.msra.mxu0 0.0
    %285 = vmatpush.msra.mxu0 0.0
    %286 = vmatpush.msra.mxu0 0.0
    %287 = vmatpush.msra.mxu0 0.0
    %288 = vmatpush.msra.mxu0 0.0
    %289 = vmatpush.msra.mxu0 0.0
    %290 = vmatpush.msra.mxu0 0.0
    %291 = vmatpush.msra.mxu0 0.0
    %292 = vmatpush.msra.mxu0 0.0
    %293 = vmatpush.msra.mxu0 %v66
    %294 = vmatpush.msra.mxu0 %v65
    %295 = vmatpush.msra.mxu0 %v64
    %296 = vmatpush.msra.mxu0 %v63
    %297 = vmatmul.f32.gmra.mxu0 %v276
    %v298 = vpop.f32.mrf.mxu0
    %v299 = vadd.f32 0.0, %v298
    %300 = vmatmul.f32.gmra.mxu0 %v279
    %v301 = vpop.f32.mrf.mxu0
    %v302 = vadd.f32 0.0, %v301
    %303 = vdwg.mxu0
    %v305 = vsel %vm115, %v180, 0
    %v308 = vsel %vm115, %v181, 0
    %310 = vmatpush.msra.mxu0 0.0
    %311 = vmatpush.msra.mxu0 0.0
    %312 = vmatpush.msra.mxu0 0.0
    %313 = vmatpush.msra.mxu0 0.0
    %314 = vmatpush.msra.mxu0 0.0
    %315 = vmatpush.msra.mxu0 0.0
    %316 = vmatpush.msra.mxu0 0.0
    %317 = vmatpush.msra.mxu0 0.0
    %318 = vmatpush.msra.mxu0 0.0
    %319 = vmatpush.msra.mxu0 0.0
    %320 = vmatpush.msra.mxu0 0.0
    %321 = vmatpush.msra.mxu0 0.0
    %322 = vmatpush.msra.mxu0 %v66
    %323 = vmatpush.msra.mxu0 %v65
    %324 = vmatpush.msra.mxu0 %v64
    %325 = vmatpush.msra.mxu0 %v63
    %326 = vmatmul.f32.gmra.mxu0 %v305
    %v327 = vpop.f32.mrf.mxu0
    %v328 = vadd.f32 0.0, %v327
    %329 = vmatmul.f32.gmra.mxu0 %v308
    %v330 = vpop.f32.mrf.mxu0
    %v331 = vadd.f32 0.0, %v330
    %332 = vdwg.mxu0
    %v334 = vsel %vm115, %v182, 0
    %v337 = vsel %vm115, %v183, 0
    %339 = vmatpush.msra.mxu0 0.0
    %340 = vmatpush.msra.mxu0 0.0
    %341 = vmatpush.msra.mxu0 0.0
    %342 = vmatpush.msra.mxu0 0.0
    %343 = vmatpush.msra.mxu0 0.0
    %344 = vmatpush.msra.mxu0 0.0
    %345 = vmatpush.msra.mxu0 0.0
    %346 = vmatpush.msra.mxu0 0.0
    %347 = vmatpush.msra.mxu0 0.0
    %348 = vmatpush.msra.mxu0 0.0
    %349 = vmatpush.msra.mxu0 0.0
    %350 = vmatpush.msra.mxu0 0.0
    %351 = vmatpush.msra.mxu0 %v66
    %352 = vmatpush.msra.mxu0 %v65
    %353 = vmatpush.msra.mxu0 %v64
    %354 = vmatpush.msra.mxu0 %v63
    %355 = vmatmul.f32.gmra.mxu0 %v334
    %v356 = vpop.f32.mrf.mxu0
    %v357 = vadd.f32 0.0, %v356
    %358 = vmatmul.f32.gmra.mxu0 %v337
    %v359 = vpop.f32.mrf.mxu0
    %v360 = vadd.f32 0.0, %v359
    %361 = vdwg.mxu0
    %v363 = vsel %vm115, %v184, 0
    %v366 = vsel %vm115, %v185, 0
    %368 = vmatpush.msra.mxu0 0.0
    %369 = vmatpush.msra.mxu0 0.0
    %370 = vmatpush.msra.mxu0 0.0
    %371 = vmatpush.msra.mxu0 0.0
    %372 = vmatpush.msra.mxu0 0.0
    %373 = vmatpush.msra.mxu0 0.0
    %374 = vmatpush.msra.mxu0 0.0
    %375 = vmatpush.msra.mxu0 0.0
    %376 = vmatpush.msra.mxu0 0.0
    %377 = vmatpush.msra.mxu0 0.0
    %378 = vmatpush.msra.mxu0 0.0
    %379 = vmatpush.msra.mxu0 0.0
    %380 = vmatpush.msra.mxu0 %v66
    %381 = vmatpush.msra.mxu0 %v65
    %382 = vmatpush.msra.mxu0 %v64
    %383 = vmatpush.msra.mxu0 %v63
    %384 = vmatmul.f32.gmra.mxu0 %v363
    %v385 = vpop.f32.mrf.mxu0
    %v386 = vadd.f32 0.0, %v385
    %387 = vmatmul.f32.gmra.mxu0 %v366
    %v388 = vpop.f32.mrf.mxu0
    %v389 = vadd.f32 0.0, %v388
    %390 = vdwg.mxu0
    %v392 = vsel %vm115, %v186, 0
    %v395 = vsel %vm115, %v187, 0
    %397 = vmatpush.msra.mxu0 0.0
    %398 = vmatpush.msra.mxu0 0.0
    %399 = vmatpush.msra.mxu0 0.0
    %400 = vmatpush.msra.mxu0 0.0
    %401 = vmatpush.msra.mxu0 0.0
    %402 = vmatpush.msra.mxu0 0.0
    %403 = vmatpush.msra.mxu0 0.0
    %404 = vmatpush.msra.mxu0 0.0
    %405 = vmatpush.msra.mxu0 0.0
    %406 = vmatpush.msra.mxu0 0.0
    %407 = vmatpush.msra.mxu0 0.0
    %408 = vmatpush.msra.mxu0 0.0
    %409 = vmatpush.msra.mxu0 %v66
    %410 = vmatpush.msra.mxu0 %v65
    %411 = vmatpush.msra.mxu0 %v64
    %412 = vmatpush.msra.mxu0 %v63
    %413 = vmatmul.f32.gmra.mxu0 %v392
    %v414 = vpop.f32.mrf.mxu0
    %v415 = vadd.f32 0.0, %v414
    %416 = vmatmul.f32.gmra.mxu0 %v395
    %v417 = vpop.f32.mrf.mxu0
    %v418 = vadd.f32 0.0, %v417
    %419 = vdwg.mxu0
    %v421 = vperm.slane %v71, 0
    %v423 = vmul.f32 %v421, %v46
    %v424 = vmul.f32 %v423, 1.442695
    %v425 = vpow.pop %v424
    %v426 = vmul.f32 %v425, %v425
    %v427 = vmax.f32 %v426, 0.0001
    %v428 = vlaneseq
    %v429 = vshrl.u32 %v428, 7
    %v430 = vadd.s32 %v429, 8
    %v431 = vlaneseq
    %v432 = vand.u32 %v431, 127
    %vm433 = vcmp.eq.s32.totalorder %v429, %v432
    %vm434 = vcmp.eq.s32.totalorder %v430, %v432
    %v435 = vsel %vm433, 1.0, 0.0
    %v436 = vsel %vm434, 1.0, 0.0
    %v438 = vrot.slane %v427, 1
    %v439 = vrot.slane %v427, 2
    %v440 = vrot.slane %v427, 3
    %v441 = vrot.slane %v427, 4
    %v442 = vrot.slane %v427, 5
    %v443 = vrot.slane %v427, 6
    %v444 = vrot.slane %v427, 7
    %v445 = vperm.slane %v427, 0
    %v446 = vperm.slane %v438, 0
    %v447 = vperm.slane %v439, 0
    %v448 = vperm.slane %v440, 0
    %v449 = vperm.slane %v441, 0
    %v450 = vperm.slane %v442, 0
    %v451 = vperm.slane %v443, 0
    %v452 = vperm.slane %v444, 0
    %v461 = vmul.f32 %v435, %v445
    %v462 = vmul.f32 %v436, %v445
    %v463 = vmul.f32 %v435, %v446
    %v464 = vmul.f32 %v436, %v446
    %v465 = vmul.f32 %v435, %v447
    %v466 = vmul.f32 %v436, %v447
    %v467 = vmul.f32 %v435, %v448
    %v468 = vmul.f32 %v436, %v448
    %v469 = vmul.f32 %v435, %v449
    %v470 = vmul.f32 %v436, %v449
    %v471 = vmul.f32 %v435, %v450
    %v472 = vmul.f32 %v436, %v450
    %v473 = vmul.f32 %v435, %v451
    %v474 = vmul.f32 %v436, %v451
    %v475 = vmul.f32 %v435, %v452
    %v476 = vmul.f32 %v436, %v452
    %v478 = vsel %vm75, %v47, 0
    %v481 = vsel %vm75, %v48, 0
    %v484 = vsel %vm75, %v212, 0
    %v487 = vsel %vm75, %v215, 0
    %489 = vmatpush.xpose.msra.mxu0 0.0
    %490 = vmatpush.xpose.msra.mxu0 0.0
    %491 = vmatpush.xpose.msra.mxu0 0.0
    %492 = vmatpush.xpose.msra.mxu0 0.0
    %493 = vmatpush.xpose.msra.mxu0 0.0
    %494 = vmatpush.xpose.msra.mxu0 0.0
    %495 = vmatpush.xpose.msra.mxu0 0.0
    %496 = vmatpush.xpose.msra.mxu0 0.0
    %497 = vmatpush.xpose.msra.mxu0 0.0
    %498 = vmatpush.xpose.msra.mxu0 0.0
    %499 = vmatpush.xpose.msra.mxu0 0.0
    %500 = vmatpush.xpose.msra.mxu0 0.0
    %501 = vmatpush.xpose.msra.mxu0 0.0
    %502 = vmatpush.xpose.msra.mxu0 0.0
    %503 = vmatpush.xpose.msra.mxu0 %v487
    %504 = vmatpush.xpose.msra.mxu0 %v484
    %505 = vmatmul.f32.gmra.mxu0 %v478
    %v506 = vpop.f32.mrf.mxu0
    %v507 = vadd.f32 0.0, %v506
    %508 = vmatmul.f32.gmra.mxu0 %v481
    %v509 = vpop.f32.mrf.mxu0
    %v510 = vadd.f32 0.0, %v509
    %511 = vdwg.mxu0
    %v513 = vsel %vm75, %v49, 0
    %v516 = vsel %vm75, %v50, 0
    %v519 = vsel %vm75, %v241, 0
    %v522 = vsel %vm75, %v244, 0
    %524 = vmatpush.xpose.msra.mxu0 0.0
    %525 = vmatpush.xpose.msra.mxu0 0.0
    %526 = vmatpush.xpose.msra.mxu0 0.0
    %527 = vmatpush.xpose.msra.mxu0 0.0
    %528 = vmatpush.xpose.msra.mxu0 0.0
    %529 = vmatpush.xpose.msra.mxu0 0.0
    %530 = vmatpush.xpose.msra.mxu0 0.0
    %531 = vmatpush.xpose.msra.mxu0 0.0
    %532 = vmatpush.xpose.msra.mxu0 0.0
    %533 = vmatpush.xpose.msra.mxu0 0.0
    %534 = vmatpush.xpose.msra.mxu0 0.0
    %535 = vmatpush.xpose.msra.mxu0 0.0
    %536 = vmatpush.xpose.msra.mxu0 0.0
    %537 = vmatpush.xpose.msra.mxu0 0.0
    %538 = vmatpush.xpose.msra.mxu0 %v522
    %539 = vmatpush.xpose.msra.mxu0 %v519
    %540 = vmatmul.f32.gmra.mxu0 %v513
    %v541 = vpop.f32.mrf.mxu0
    %v542 = vadd.f32 0.0, %v541
    %543 = vmatmul.f32.gmra.mxu0 %v516
    %v544 = vpop.f32.mrf.mxu0
    %v545 = vadd.f32 0.0, %v544
    %546 = vdwg.mxu0
    %v548 = vsel %vm75, %v51, 0
    %v551 = vsel %vm75, %v52, 0
    %v554 = vsel %vm75, %v270, 0
    %v557 = vsel %vm75, %v273, 0
    %559 = vmatpush.xpose.msra.mxu0 0.0
    %560 = vmatpush.xpose.msra.mxu0 0.0
    %561 = vmatpush.xpose.msra.mxu0 0.0
    %562 = vmatpush.xpose.msra.mxu0 0.0
    %563 = vmatpush.xpose.msra.mxu0 0.0
    %564 = vmatpush.xpose.msra.mxu0 0.0
    %565 = vmatpush.xpose.msra.mxu0 0.0
    %566 = vmatpush.xpose.msra.mxu0 0.0
    %567 = vmatpush.xpose.msra.mxu0 0.0
    %568 = vmatpush.xpose.msra.mxu0 0.0
    %569 = vmatpush.xpose.msra.mxu0 0.0
    %570 = vmatpush.xpose.msra.mxu0 0.0
    %571 = vmatpush.xpose.msra.mxu0 0.0
    %572 = vmatpush.xpose.msra.mxu0 0.0
    %573 = vmatpush.xpose.msra.mxu0 %v557
    %574 = vmatpush.xpose.msra.mxu0 %v554
    %575 = vmatmul.f32.gmra.mxu0 %v548
    %v576 = vpop.f32.mrf.mxu0
    %v577 = vadd.f32 0.0, %v576
    %578 = vmatmul.f32.gmra.mxu0 %v551
    %v579 = vpop.f32.mrf.mxu0
    %v580 = vadd.f32 0.0, %v579
    %581 = vdwg.mxu0
    %v583 = vsel %vm75, %v53, 0
    %v586 = vsel %vm75, %v54, 0
    %v589 = vsel %vm75, %v299, 0
    %v592 = vsel %vm75, %v302, 0
    %594 = vmatpush.xpose.msra.mxu0 0.0
    %595 = vmatpush.xpose.msra.mxu0 0.0
    %596 = vmatpush.xpose.msra.mxu0 0.0
    %597 = vmatpush.xpose.msra.mxu0 0.0
    %598 = vmatpush.xpose.msra.mxu0 0.0
    %599 = vmatpush.xpose.msra.mxu0 0.0
    %600 = vmatpush.xpose.msra.mxu0 0.0
    %601 = vmatpush.xpose.msra.mxu0 0.0
    %602 = vmatpush.xpose.msra.mxu0 0.0
    %603 = vmatpush.xpose.msra.mxu0 0.0
    %604 = vmatpush.xpose.msra.mxu0 0.0
    %605 = vmatpush.xpose.msra.mxu0 0.0
    %606 = vmatpush.xpose.msra.mxu0 0.0
    %607 = vmatpush.xpose.msra.mxu0 0.0
    %608 = vmatpush.xpose.msra.mxu0 %v592
    %609 = vmatpush.xpose.msra.mxu0 %v589
    %610 = vmatmul.f32.gmra.mxu0 %v583
    %v611 = vpop.f32.mrf.mxu0
    %v612 = vadd.f32 0.0, %v611
    %613 = vmatmul.f32.gmra.mxu0 %v586
    %v614 = vpop.f32.mrf.mxu0
    %v615 = vadd.f32 0.0, %v614
    %616 = vdwg.mxu0
    %v618 = vsel %vm75, %v55, 0
    %v621 = vsel %vm75, %v56, 0
    %v624 = vsel %vm75, %v328, 0
    %v627 = vsel %vm75, %v331, 0
    %629 = vmatpush.xpose.msra.mxu0 0.0
    %630 = vmatpush.xpose.msra.mxu0 0.0
    %631 = vmatpush.xpose.msra.mxu0 0.0
    %632 = vmatpush.xpose.msra.mxu0 0.0
    %633 = vmatpush.xpose.msra.mxu0 0.0
    %634 = vmatpush.xpose.msra.mxu0 0.0
    %635 = vmatpush.xpose.msra.mxu0 0.0
    %636 = vmatpush.xpose.msra.mxu0 0.0
    %637 = vmatpush.xpose.msra.mxu0 0.0
    %638 = vmatpush.xpose.msra.mxu0 0.0
    %639 = vmatpush.xpose.msra.mxu0 0.0
    %640 = vmatpush.xpose.msra.mxu0 0.0
    %641 = vmatpush.xpose.msra.mxu0 0.0
    %642 = vmatpush.xpose.msra.mxu0 0.0
    %643 = vmatpush.xpose.msra.mxu0 %v627
    %644 = vmatpush.xpose.msra.mxu0 %v624
    %645 = vmatmul.f32.gmra.mxu0 %v618
    %v646 = vpop.f32.mrf.mxu0
    %v647 = vadd.f32 0.0, %v646
    %648 = vmatmul.f32.gmra.mxu0 %v621
    %v649 = vpop.f32.mrf.mxu0
    %v650 = vadd.f32 0.0, %v649
    %651 = vdwg.mxu0
    %v653 = vsel %vm75, %v57, 0
    %v656 = vsel %vm75, %v58, 0
    %v659 = vsel %vm75, %v357, 0
    %v662 = vsel %vm75, %v360, 0
    %664 = vmatpush.xpose.msra.mxu0 0.0
    %665 = vmatpush.xpose.msra.mxu0 0.0
    %666 = vmatpush.xpose.msra.mxu0 0.0
    %667 = vmatpush.xpose.msra.mxu0 0.0
    %668 = vmatpush.xpose.msra.mxu0 0.0
    %669 = vmatpush.xpose.msra.mxu0 0.0
    %670 = vmatpush.xpose.msra.mxu0 0.0
    %671 = vmatpush.xpose.msra.mxu0 0.0
    %672 = vmatpush.xpose.msra.mxu0 0.0
    %673 = vmatpush.xpose.msra.mxu0 0.0
    %674 = vmatpush.xpose.msra.mxu0 0.0
    %675 = vmatpush.xpose.msra.mxu0 0.0
    %676 = vmatpush.xpose.msra.mxu0 0.0
    %677 = vmatpush.xpose.msra.mxu0 0.0
    %678 = vmatpush.xpose.msra.mxu0 %v662
    %679 = vmatpush.xpose.msra.mxu0 %v659
    %680 = vmatmul.f32.gmra.mxu0 %v653
    %v681 = vpop.f32.mrf.mxu0
    %v682 = vadd.f32 0.0, %v681
    %683 = vmatmul.f32.gmra.mxu0 %v656
    %v684 = vpop.f32.mrf.mxu0
    %v685 = vadd.f32 0.0, %v684
    %686 = vdwg.mxu0
    %v688 = vsel %vm75, %v59, 0
    %v691 = vsel %vm75, %v60, 0
    %v694 = vsel %vm75, %v386, 0
    %v697 = vsel %vm75, %v389, 0
    %699 = vmatpush.xpose.msra.mxu0 0.0
    %700 = vmatpush.xpose.msra.mxu0 0.0
    %701 = vmatpush.xpose.msra.mxu0 0.0
    %702 = vmatpush.xpose.msra.mxu0 0.0
    %703 = vmatpush.xpose.msra.mxu0 0.0
    %704 = vmatpush.xpose.msra.mxu0 0.0
    %705 = vmatpush.xpose.msra.mxu0 0.0
    %706 = vmatpush.xpose.msra.mxu0 0.0
    %707 = vmatpush.xpose.msra.mxu0 0.0
    %708 = vmatpush.xpose.msra.mxu0 0.0
    %709 = vmatpush.xpose.msra.mxu0 0.0
    %710 = vmatpush.xpose.msra.mxu0 0.0
    %711 = vmatpush.xpose.msra.mxu0 0.0
    %712 = vmatpush.xpose.msra.mxu0 0.0
    %713 = vmatpush.xpose.msra.mxu0 %v697
    %714 = vmatpush.xpose.msra.mxu0 %v694
    %715 = vmatmul.f32.gmra.mxu0 %v688
    %v716 = vpop.f32.mrf.mxu0
    %v717 = vadd.f32 0.0, %v716
    %718 = vmatmul.f32.gmra.mxu0 %v691
    %v719 = vpop.f32.mrf.mxu0
    %v720 = vadd.f32 0.0, %v719
    %721 = vdwg.mxu0
    %v723 = vsel %vm75, %v61, 0
    %v726 = vsel %vm75, %v62, 0
    %v729 = vsel %vm75, %v415, 0
    %v732 = vsel %vm75, %v418, 0
    %734 = vmatpush.xpose.msra.mxu0 0.0
    %735 = vmatpush.xpose.msra.mxu0 0.0
    %736 = vmatpush.xpose.msra.mxu0 0.0
    %737 = vmatpush.xpose.msra.mxu0 0.0
    %738 = vmatpush.xpose.msra.mxu0 0.0
    %739 = vmatpush.xpose.msra.mxu0 0.0
    %740 = vmatpush.xpose.msra.mxu0 0.0
    %741 = vmatpush.xpose.msra.mxu0 0.0
    %742 = vmatpush.xpose.msra.mxu0 0.0
    %743 = vmatpush.xpose.msra.mxu0 0.0
    %744 = vmatpush.xpose.msra.mxu0 0.0
    %745 = vmatpush.xpose.msra.mxu0 0.0
    %746 = vmatpush.xpose.msra.mxu0 0.0
    %747 = vmatpush.xpose.msra.mxu0 0.0
    %748 = vmatpush.xpose.msra.mxu0 %v732
    %749 = vmatpush.xpose.msra.mxu0 %v729
    %750 = vmatmul.f32.gmra.mxu0 %v723
    %v751 = vpop.f32.mrf.mxu0
    %v752 = vadd.f32 0.0, %v751
    %753 = vmatmul.f32.gmra.mxu0 %v726
    %v754 = vpop.f32.mrf.mxu0
    %v755 = vadd.f32 0.0, %v754
    %756 = vdwg.mxu0
    %757 = vmatpush.msra.mxu0 0.0
    %758 = vmatpush.msra.mxu0 0.0
    %759 = vmatpush.msra.mxu0 0.0
    %760 = vmatpush.msra.mxu0 0.0
    %761 = vmatpush.msra.mxu0 0.0
    %762 = vmatpush.msra.mxu0 0.0
    %763 = vmatpush.msra.mxu0 0.0
    %764 = vmatpush.msra.mxu0 0.0
    %765 = vmatpush.msra.mxu0 0.0
    %766 = vmatpush.msra.mxu0 0.0
    %767 = vmatpush.msra.mxu0 0.0
    %768 = vmatpush.msra.mxu0 0.0
    %769 = vmatpush.msra.mxu0 0.0
    %770 = vmatpush.msra.mxu0 0.0
    %771 = vmatpush.msra.mxu0 %v48
    %772 = vmatpush.msra.mxu0 %v47
    %773 = vmatmul.f32.gmra.mxu0 %v484
    %v774 = vpop.f32.mrf.mxu0
    %v775 = vadd.f32 %v507, %v774
    %776 = vmatmul.f32.gmra.mxu0 %v487
    %v777 = vpop.f32.mrf.mxu0
    %v778 = vadd.f32 %v510, %v777
    %779 = vdwg.mxu0
    %780 = vmatpush.msra.mxu0 0.0
    %781 = vmatpush.msra.mxu0 0.0
    %782 = vmatpush.msra.mxu0 0.0
    %783 = vmatpush.msra.mxu0 0.0
    %784 = vmatpush.msra.mxu0 0.0
    %785 = vmatpush.msra.mxu0 0.0
    %786 = vmatpush.msra.mxu0 0.0
    %787 = vmatpush.msra.mxu0 0.0
    %788 = vmatpush.msra.mxu0 0.0
    %789 = vmatpush.msra.mxu0 0.0
    %790 = vmatpush.msra.mxu0 0.0
    %791 = vmatpush.msra.mxu0 0.0
    %792 = vmatpush.msra.mxu0 0.0
    %793 = vmatpush.msra.mxu0 0.0
    %794 = vmatpush.msra.mxu0 %v50
    %795 = vmatpush.msra.mxu0 %v49
    %796 = vmatmul.f32.gmra.mxu0 %v519
    %v797 = vpop.f32.mrf.mxu0
    %v798 = vadd.f32 %v542, %v797
    %799 = vmatmul.f32.gmra.mxu0 %v522
    %v800 = vpop.f32.mrf.mxu0
    %v801 = vadd.f32 %v545, %v800
    %802 = vdwg.mxu0
    %803 = vmatpush.msra.mxu0 0.0
    %804 = vmatpush.msra.mxu0 0.0
    %805 = vmatpush.msra.mxu0 0.0
    %806 = vmatpush.msra.mxu0 0.0
    %807 = vmatpush.msra.mxu0 0.0
    %808 = vmatpush.msra.mxu0 0.0
    %809 = vmatpush.msra.mxu0 0.0
    %810 = vmatpush.msra.mxu0 0.0
    %811 = vmatpush.msra.mxu0 0.0
    %812 = vmatpush.msra.mxu0 0.0
    %813 = vmatpush.msra.mxu0 0.0
    %814 = vmatpush.msra.mxu0 0.0
    %815 = vmatpush.msra.mxu0 0.0
    %816 = vmatpush.msra.mxu0 0.0
    %817 = vmatpush.msra.mxu0 %v52
    %818 = vmatpush.msra.mxu0 %v51
    %819 = vmatmul.f32.gmra.mxu0 %v554
    %v820 = vpop.f32.mrf.mxu0
    %v821 = vadd.f32 %v577, %v820
    %822 = vmatmul.f32.gmra.mxu0 %v557
    %v823 = vpop.f32.mrf.mxu0
    %v824 = vadd.f32 %v580, %v823
    %825 = vdwg.mxu0
    %826 = vmatpush.msra.mxu0 0.0
    %827 = vmatpush.msra.mxu0 0.0
    %828 = vmatpush.msra.mxu0 0.0
    %829 = vmatpush.msra.mxu0 0.0
    %830 = vmatpush.msra.mxu0 0.0
    %831 = vmatpush.msra.mxu0 0.0
    %832 = vmatpush.msra.mxu0 0.0
    %833 = vmatpush.msra.mxu0 0.0
    %834 = vmatpush.msra.mxu0 0.0
    %835 = vmatpush.msra.mxu0 0.0
    %836 = vmatpush.msra.mxu0 0.0
    %837 = vmatpush.msra.mxu0 0.0
    %838 = vmatpush.msra.mxu0 0.0
    %839 = vmatpush.msra.mxu0 0.0
    %840 = vmatpush.msra.mxu0 %v54
    %841 = vmatpush.msra.mxu0 %v53
    %842 = vmatmul.f32.gmra.mxu0 %v589
    %v843 = vpop.f32.mrf.mxu0
    %v844 = vadd.f32 %v612, %v843
    %845 = vmatmul.f32.gmra.mxu0 %v592
    %v846 = vpop.f32.mrf.mxu0
    %v847 = vadd.f32 %v615, %v846
    %848 = vdwg.mxu0
    %849 = vmatpush.msra.mxu0 0.0
    %850 = vmatpush.msra.mxu0 0.0
    %851 = vmatpush.msra.mxu0 0.0
    %852 = vmatpush.msra.mxu0 0.0
    %853 = vmatpush.msra.mxu0 0.0
    %854 = vmatpush.msra.mxu0 0.0
    %855 = vmatpush.msra.mxu0 0.0
    %856 = vmatpush.msra.mxu0 0.0
    %857 = vmatpush.msra.mxu0 0.0
    %858 = vmatpush.msra.mxu0 0.0
    %859 = vmatpush.msra.mxu0 0.0
    %860 = vmatpush.msra.mxu0 0.0
    %861 = vmatpush.msra.mxu0 0.0
    %862 = vmatpush.msra.mxu0 0.0
    %863 = vmatpush.msra.mxu0 %v56
    %864 = vmatpush.msra.mxu0 %v55
    %865 = vmatmul.f32.gmra.mxu0 %v624
    %v866 = vpop.f32.mrf.mxu0
    %v867 = vadd.f32 %v647, %v866
    %868 = vmatmul.f32.gmra.mxu0 %v627
    %v869 = vpop.f32.mrf.mxu0
    %v870 = vadd.f32 %v650, %v869
    %871 = vdwg.mxu0
    %872 = vmatpush.msra.mxu0 0.0
    %873 = vmatpush.msra.mxu0 0.0
    %874 = vmatpush.msra.mxu0 0.0
    %875 = vmatpush.msra.mxu0 0.0
    %876 = vmatpush.msra.mxu0 0.0
    %877 = vmatpush.msra.mxu0 0.0
    %878 = vmatpush.msra.mxu0 0.0
    %879 = vmatpush.msra.mxu0 0.0
    %880 = vmatpush.msra.mxu0 0.0
    %881 = vmatpush.msra.mxu0 0.0
    %882 = vmatpush.msra.mxu0 0.0
    %883 = vmatpush.msra.mxu0 0.0
    %884 = vmatpush.msra.mxu0 0.0
    %885 = vmatpush.msra.mxu0 0.0
    %886 = vmatpush.msra.mxu0 %v58
    %887 = vmatpush.msra.mxu0 %v57
    %888 = vmatmul.f32.gmra.mxu0 %v659
    %v889 = vpop.f32.mrf.mxu0
    %v890 = vadd.f32 %v682, %v889
    %891 = vmatmul.f32.gmra.mxu0 %v662
    %v892 = vpop.f32.mrf.mxu0
    %v893 = vadd.f32 %v685, %v892
    %894 = vdwg.mxu0
    %895 = vmatpush.msra.mxu0 0.0
    %896 = vmatpush.msra.mxu0 0.0
    %897 = vmatpush.msra.mxu0 0.0
    %898 = vmatpush.msra.mxu0 0.0
    %899 = vmatpush.msra.mxu0 0.0
    %900 = vmatpush.msra.mxu0 0.0
    %901 = vmatpush.msra.mxu0 0.0
    %902 = vmatpush.msra.mxu0 0.0
    %903 = vmatpush.msra.mxu0 0.0
    %904 = vmatpush.msra.mxu0 0.0
    %905 = vmatpush.msra.mxu0 0.0
    %906 = vmatpush.msra.mxu0 0.0
    %907 = vmatpush.msra.mxu0 0.0
    %908 = vmatpush.msra.mxu0 0.0
    %909 = vmatpush.msra.mxu0 %v60
    %910 = vmatpush.msra.mxu0 %v59
    %911 = vmatmul.f32.gmra.mxu0 %v694
    %v912 = vpop.f32.mrf.mxu0
    %v913 = vadd.f32 %v717, %v912
    %914 = vmatmul.f32.gmra.mxu0 %v697
    %v915 = vpop.f32.mrf.mxu0
    %v916 = vadd.f32 %v720, %v915
    %917 = vdwg.mxu0
    %918 = vmatpush.msra.mxu0 0.0
    %919 = vmatpush.msra.mxu0 0.0
    %920 = vmatpush.msra.mxu0 0.0
    %921 = vmatpush.msra.mxu0 0.0
    %922 = vmatpush.msra.mxu0 0.0
    %923 = vmatpush.msra.mxu0 0.0
    %924 = vmatpush.msra.mxu0 0.0
    %925 = vmatpush.msra.mxu0 0.0
    %926 = vmatpush.msra.mxu0 0.0
    %927 = vmatpush.msra.mxu0 0.0
    %928 = vmatpush.msra.mxu0 0.0
    %929 = vmatpush.msra.mxu0 0.0
    %930 = vmatpush.msra.mxu0 0.0
    %931 = vmatpush.msra.mxu0 0.0
    %932 = vmatpush.msra.mxu0 %v62
    %933 = vmatpush.msra.mxu0 %v61
    %934 = vmatmul.f32.gmra.mxu0 %v729
    %v935 = vpop.f32.mrf.mxu0
    %v936 = vadd.f32 %v752, %v935
    %937 = vmatmul.f32.gmra.mxu0 %v732
    %v938 = vpop.f32.mrf.mxu0
    %v939 = vadd.f32 %v755, %v938
    %940 = vdwg.mxu0
    %v941 = vadd.f32 %v775, %v461
    %v942 = vadd.f32 %v778, %v462
    %v943 = vadd.f32 %v798, %v463
    %v944 = vadd.f32 %v801, %v464
    %v945 = vadd.f32 %v821, %v465
    %v946 = vadd.f32 %v824, %v466
    %v947 = vadd.f32 %v844, %v467
    %v948 = vadd.f32 %v847, %v468
    %v949 = vadd.f32 %v867, %v469
    %v950 = vadd.f32 %v870, %v470
    %v951 = vadd.f32 %v890, %v471
    %v952 = vadd.f32 %v893, %v472
    %v953 = vadd.f32 %v913, %v473
    %v954 = vadd.f32 %v916, %v474
    %v955 = vadd.f32 %v936, %v475
    %v956 = vadd.f32 %v939, %v476
    %957 = vst.msk [vmem:[#allocation6] sm:$0xff] %vm75, %v941
    %958 = vst.msk [vmem:[#allocation6 + $0x8] sm:$0xff] %vm75, %v942
    %959 = vst.msk [vmem:[#allocation6 + $0x10] sm:$0xff] %vm75, %v943
    %960 = vst.msk [vmem:[#allocation6 + $0x18] sm:$0xff] %vm75, %v944
    %961 = vst.msk [vmem:[#allocation6 + $0x20] sm:$0xff] %vm75, %v945
    %962 = vst.msk [vmem:[#allocation6 + $0x28] sm:$0xff] %vm75, %v946
    %963 = vst.msk [vmem:[#allocation6 + $0x30] sm:$0xff] %vm75, %v947
    %964 = vst.msk [vmem:[#allocation6 + $0x38] sm:$0xff] %vm75, %v948
    %965 = vst.msk [vmem:[#allocation6 + $0x40] sm:$0xff] %vm75, %v949
    %966 = vst.msk [vmem:[#allocation6 + $0x48] sm:$0xff] %vm75, %v950
    %967 = vst.msk [vmem:[#allocation6 + $0x50] sm:$0xff] %vm75, %v951
    %968 = vst.msk [vmem:[#allocation6 + $0x58] sm:$0xff] %vm75, %v952
    %969 = vst.msk [vmem:[#allocation6 + $0x60] sm:$0xff] %vm75, %v953
    %970 = vst.msk [vmem:[#allocation6 + $0x68] sm:$0xff] %vm75, %v954
    %971 = vst.msk [vmem:[#allocation6 + $0x70] sm:$0xff] %vm75, %v955
    %972 = vst.msk [vmem:[#allocation6 + $0x78] sm:$0xff] %vm75, %v956
    // Predicated region
    $region34: #{tpu_custom_call.1} parent=1 // pred_check
      _
    $region35: #{tpu_custom_call.1} parent=1 // pred_check_branch
      %974 = sbr.rel (0) target = $region37
    $region36: #{tpu_custom_call.1} parent=1 // pred_region
      %976 = vsyncadd [#allocation4], 0
      %s978 = sshll.u32 [#allocation5], 4
      %s979 = int_to_ptr.vmem [resolvable:$true] %s978
      %s980 = sshll.u32 %s7, 4
      %s981 = int_to_ptr.hbm [resolvable:$true] %s980
      %983 = dma.vmem_to_hbm [thread:$0]  %s979, 128, %s981, [#allocation4]
    $region37: #{tpu_custom_call.1} parent=1 // pred_fallthru
      _
    // Predicated region
    $region38: #{tpu_custom_call.1} parent=1 // pred_check
      _
    $region39: #{tpu_custom_call.1} parent=1 // pred_check_branch
      %985 = sbr.rel (0) target = $region41
    $region40: #{tpu_custom_call.1} parent=1 // pred_region
      %987 = vsyncadd [#allocation7], 0
      %s988 = sshll.u32 [#allocation6], 4
      %s989 = int_to_ptr.vmem [resolvable:$true] %s988
      %s990 = sshll.u32 %s8, 4
      %s991 = int_to_ptr.hbm [resolvable:$true] %s990
      %996 = dma.vmem_to_hbm [thread:$0]  %s989, 2048, %s991, [#allocation7], 128, 128, 8
    $region41: #{tpu_custom_call.1} parent=1 // pred_fallthru
      _
    // Predicated region
    $region42: #{tpu_custom_call.1} parent=1 // pred_check
      _
    $region43: #{tpu_custom_call.1} parent=1 // pred_check_branch
      %998 = sbr.rel (0) target = $region45
    $region44: #{tpu_custom_call.1} parent=1 // pred_region
      %1000 = dma.done [#allocation4], 128
    $region45: #{tpu_custom_call.1} parent=1 // pred_fallthru
      _
    // Predicated region
    $region46: #{tpu_custom_call.1} parent=1 // pred_check
      _
    $region47: #{tpu_custom_call.1} parent=1 // pred_check_branch
      %1002 = sbr.rel (0) target = $region49
    $region48: #{tpu_custom_call.1} parent=1 // pred_region
      %1004 = dma.done [#allocation7], 2048
    $region49: #{tpu_custom_call.1} parent=1 // pred_fallthru
      _
    %1005 = vsyncpa [#allocation3], 1
    %1006 = vsyncpa [#allocation4], 1
    %1007 = vsyncpa [#allocation7], 1

</llo_original>
